<compile_context>
chip_gen: v7x
topology: tpu7x:2x2x1
jax: 0.10.0
libtpu: 0.0.40
codegen_flags: <defaults>
</compile_context>

<pallas_src>
import math

import jax
import jax.numpy as jnp
from jax.experimental import pallas as pl
from jax.experimental.pallas import tpu as pltpu


def _read_unit_kernel(img_ref, tpm_ref, ctrl_ref, w_att_ref,
                      w_ie_ref, b_ie_ref,
                      w_it_int_ref, w_it_img_ref, b_it_ref,
                      readrep_ref, scores_ref):
    Bb, N, D = img_ref.shape

    img3 = img_ref[...]                          # (Bb, N, D) bf16
    img2 = img3.reshape(Bb * N, D)               # layout-trivial collapse (N % 8 == 0)

    # image_element_transformer: one fat bf16 MXU matmul, f32 accumulate.
    ti2 = (jnp.dot(img2, w_ie_ref[...], preferred_element_type=jnp.float32)
           + b_ie_ref[...])                      # (Bb*N, D) f32
    ti3 = ti2.reshape(Bb, N, D)

    # trans_pre_memory (precomputed in the wrapper) broadcast over spatial dims.
    inter3 = tpm_ref[...] * ti3                  # (Bb, N, D) f32
    inter2 = inter3.reshape(Bb * N, D)

    # intermediate_transformer on cat([inter, ti], -1) == two split-weight matmuls.
    t2 = (jnp.dot(inter2.astype(jnp.bfloat16), w_it_int_ref[...],
                  preferred_element_type=jnp.float32)
          + jnp.dot(ti2.astype(jnp.bfloat16), w_it_img_ref[...],
                    preferred_element_type=jnp.float32)
          + b_it_ref[...])
    t2 = jnp.maximum(t2, 0.0)                    # ReLU
    t3 = t2.reshape(Bb, N, D)

    # current_control broadcast * ReLU.
    isc3 = jnp.maximum(ctrl_ref[...] * t3, 0.0)  # (Bb, N, D) f32

    # read_attention_transformer -> lane-dense logits (Bb, 1, N).
    # (b_att omitted: softmax over N is shift-invariant.)
    s = jnp.einsum('bqd,bnd->bqn', w_att_ref[...], isc3,
                   preferred_element_type=jnp.float32)     # (Bb, 1, N)

    # Softmax over the N spatial locations of each batch element (lane axis).
    s = s - jnp.max(s, axis=-1, keepdims=True)
    e = jnp.exp(s)
    p = e * pl.reciprocal(jnp.sum(e, axis=-1, keepdims=True), approx=True)

    scores_ref[...] = p                          # lane-dense (Bb, 1, N) store

    # readrep = softmax-weighted sum of image rows, as a batched MXU matmul.
    readrep_ref[...] = jnp.einsum('bqn,bnd->bqd', p.astype(jnp.bfloat16), img3,
                                  preferred_element_type=jnp.float32)


def init_read_unit_params(key, common_dim):
    """Deterministic xavier_uniform weights, zero biases (matches init_modules)."""
    D = common_dim
    ks = jax.random.split(key, 4)

    def xavier(k, out_dim, in_dim):
        bound = math.sqrt(6.0 / (in_dim + out_dim))
        return jax.random.uniform(k, (out_dim, in_dim), jnp.float32, -bound, bound)

    return {
        "w_pm": xavier(ks[0], D, D), "b_pm": jnp.zeros((D,), jnp.float32),
        "w_ie": xavier(ks[1], D, D), "b_ie": jnp.zeros((D,), jnp.float32),
        "w_it": xavier(ks[2], D, 2 * D), "b_it": jnp.zeros((D,), jnp.float32),
        "w_att": xavier(ks[3], 1, D), "b_att": jnp.zeros((1,), jnp.float32),
    }


def read_unit_forward(pre_memory, current_control, image_nchw, params, *, block_b=None):
    B, D, H, W = image_nchw.shape
    N = H * W

    if block_b is None:
        # Whole batch in one grid step for small problems.  On v7x (2 TCs) pick
        # block_b = B // 2 so the 'parallel' grid axis keeps both cores busy.
        block_b = B
    assert B % block_b == 0
    grid = (B // block_b,)

    # NHWC, spatial flattened, bf16 matmul operand.
    img = jnp.transpose(image_nchw, (0, 2, 3, 1)).reshape(B, N, D).astype(jnp.bfloat16)

    # Hoisted pre_memory_transformer: one XLA matmul in f32, passed per batch row.
    tpm = (pre_memory @ params["w_pm"].T + params["b_pm"]).reshape(B, 1, D)
    ctrl = current_control.reshape(B, 1, D).astype(jnp.float32)

    # Pre-transpose PyTorch-convention (out, in) weights to (in, out); bf16 for MXU.
    w_ie = params["w_ie"].T.astype(jnp.bfloat16)
    b_ie = params["b_ie"].reshape(1, D)                         # f32
    w_it_t = params["w_it"].T                                   # (2D, D)
    w_it_int = w_it_t[:D].astype(jnp.bfloat16)                  # applies to `intermediate`
    w_it_img = w_it_t[D:].astype(jnp.bfloat16)                  # applies to `trans_image`
    b_it = params["b_it"].reshape(1, D)                         # f32
    # b_att dropped entirely (softmax shift-invariance); w_att as a per-batch row
    # so the attention projection is a batched lane-dense matmul in-kernel.
    w_att = jnp.broadcast_to(params["w_att"].reshape(1, 1, D), (B, 1, D)).astype(jnp.float32)

    def const(shape):
        return pl.BlockSpec(shape, lambda b, _n=len(shape): (0,) * _n)

    in_specs = [
        pl.BlockSpec((block_b, N, D), lambda b: (b, 0, 0)),     # image (bf16)
        pl.BlockSpec((block_b, 1, D), lambda b: (b, 0, 0)),     # tpm (hoisted transform)
        pl.BlockSpec((block_b, 1, D), lambda b: (b, 0, 0)),     # current_control
        pl.BlockSpec((block_b, 1, D), lambda b: (b, 0, 0)),     # w_att row per batch
        const((D, D)), const((1, D)),                           # image_element_transformer
        const((D, D)), const((D, D)), const((1, D)),            # intermediate_transformer (split)
    ]
    out_specs = [
        pl.BlockSpec((block_b, 1, D), lambda b: (b, 0, 0)),     # readrep
        pl.BlockSpec((block_b, 1, N), lambda b: (b, 0, 0)),     # scores (lane-dense over N)
    ]

    readrep, scores = pl.pallas_call(
        _read_unit_kernel,
        out_shape=(jax.ShapeDtypeStruct((B, 1, D), jnp.float32),
                   jax.ShapeDtypeStruct((B, 1, N), jnp.float32)),
        grid=grid,
        in_specs=in_specs,
        out_specs=out_specs,
        compiler_params=pltpu.CompilerParams(dimension_semantics=("parallel",)),
    )(img, tpm, ctrl, w_att, w_ie, b_ie, w_it_int, w_it_img, b_it)

    return readrep.reshape(B, D), scores.reshape(B, H, W)


def read_unit_reference(pre_memory, current_control, image_nchw, params):
    """Pure-JAX f32 reference mirroring the PyTorch forward (eval mode)."""
    B, D, H, W = image_nchw.shape
    img = jnp.transpose(image_nchw, (0, 2, 3, 1))                     # (B,H,W,D)
    tpm = pre_memory @ params["w_pm"].T + params["b_pm"]
    ti = img @ params["w_ie"].T + params["b_ie"]
    inter = tpm[:, None, None, :] * ti
    cat = jnp.concatenate([inter, ti], axis=-1)
    t_int = jax.nn.relu(cat @ params["w_it"].T + params["b_it"])
    isc = jax.nn.relu(current_control[:, None, None, :] * t_int)
    scores = (isc @ params["w_att"].T + params["b_att"])[..., 0]      # (B,H,W)
    r = scores.reshape(B, -1)
    r = jnp.exp(r - r.max(axis=1, keepdims=True))
    r = r / r.sum(axis=1, keepdims=True)
    scores = r.reshape(B, H, W)
    readrep = (img * scores[..., None]).reshape(B, -1, D).sum(axis=1)
    return readrep, scores


if __name__ == "__main__":
    B, D, H, W = 2, 32, 8, 8

    key = jax.random.PRNGKey(0)
    k_pm, k_cc, k_img, k_params = jax.random.split(key, 4)
    pre_memory = jax.random.normal(k_pm, (B, D), jnp.float32)
    current_control = jax.random.normal(k_cc, (B, D), jnp.float32)
    image = jax.random.normal(k_img, (B, D, H, W), jnp.float32)        # NCHW like PyTorch
    params = init_read_unit_params(k_params, D)

    readrep, scores = read_unit_forward(pre_memory, current_control, image, params)
    readrep = jax.block_until_ready(readrep)
    scores = jax.block_until_ready(scores)

    ref_readrep, ref_scores = read_unit_reference(pre_memory, current_control, image, params)
    assert readrep.shape == (B, D) and scores.shape == (B, H, W)
    # bf16 matmul operands (f32 accumulation) + approx reciprocal -> relaxed tolerances.
    assert jnp.allclose(readrep, ref_readrep, rtol=5e-2, atol=1e-2), (
        float(jnp.max(jnp.abs(readrep - ref_readrep))))
    assert jnp.allclose(scores, ref_scores, rtol=5e-2, atol=2e-3), (
        float(jnp.max(jnp.abs(scores - ref_scores))))

    print("KERNEL_OK")
</pallas_src>

<mosaic_0001>
module attributes {stable_mosaic.version = 11 : i64} {
  func.func @_read_unit_kernel(%arg0: i32, %arg1: memref<2x64x32xbf16, #tpu.memory_space<vmem>>, %arg2: memref<2x1x32xf32, #tpu.memory_space<vmem>>, %arg3: memref<2x1x32xf32, #tpu.memory_space<vmem>>, %arg4: memref<2x1x32xf32, #tpu.memory_space<vmem>>, %arg5: memref<32x32xbf16, #tpu.memory_space<vmem>>, %arg6: memref<1x32xf32, #tpu.memory_space<vmem>>, %arg7: memref<32x32xbf16, #tpu.memory_space<vmem>>, %arg8: memref<32x32xbf16, #tpu.memory_space<vmem>>, %arg9: memref<1x32xf32, #tpu.memory_space<vmem>>, %arg10: memref<2x1x32xf32, #tpu.memory_space<vmem>>, %arg11: memref<2x1x64xf32, #tpu.memory_space<vmem>>) attributes {dimension_semantics = [#tpu.dimension_semantics<parallel>], iteration_bounds = array<i64: 1>, scalar_prefetch = 0 : i64, scratch_operands = 0 : i64, tpu.core_type = #tpu.core_type<tc>, window_params = [{transform_indices = @transform_0, window_bounds = array<i64: 2, 64, 32>}, {transform_indices = @transform_1, window_bounds = array<i64: 2, 1, 32>}, {transform_indices = @transform_2, window_bounds = array<i64: 2, 1, 32>}, {transform_indices = @transform_3, window_bounds = array<i64: 2, 1, 32>}, {pipeline_mode = #tpu.pipeline_mode<synchronous>, transform_indices = @transform_4, window_bounds = array<i64: 32, 32>}, {pipeline_mode = #tpu.pipeline_mode<synchronous>, transform_indices = @transform_5, window_bounds = array<i64: 1, 32>}, {pipeline_mode = #tpu.pipeline_mode<synchronous>, transform_indices = @transform_6, window_bounds = array<i64: 32, 32>}, {pipeline_mode = #tpu.pipeline_mode<synchronous>, transform_indices = @transform_7, window_bounds = array<i64: 32, 32>}, {pipeline_mode = #tpu.pipeline_mode<synchronous>, transform_indices = @transform_8, window_bounds = array<i64: 1, 32>}, {transform_indices = @transform_9, window_bounds = array<i64: 2, 1, 32>}, {transform_indices = @transform_10, window_bounds = array<i64: 2, 1, 64>}]} {
    %c0 = arith.constant 0 : index
    %c0_0 = arith.constant 0 : index
    %c0_1 = arith.constant 0 : index
    %0 = vector.load %arg1[%c0, %c0_0, %c0_1] : memref<2x64x32xbf16, #tpu.memory_space<vmem>>, vector<2x64x32xbf16>
    %1 = vector.shape_cast %0 : vector<2x64x32xbf16> to vector<128x32xbf16>
    %c0_2 = arith.constant 0 : index
    %c0_3 = arith.constant 0 : index
    %2 = vector.load %arg5[%c0_2, %c0_3] : memref<32x32xbf16, #tpu.memory_space<vmem>>, vector<32x32xbf16>
    %cst = arith.constant dense<0.000000e+00> : vector<128x32xf32>
    %3 = tpu.matmul %1, %2, %cst {dimension_numbers = #tpu.dot_dimension_numbers<[1], [0], [0], [1], [0, 0, 1, 1], [], []>} : vector<128x32xbf16>, vector<32x32xbf16>, vector<128x32xf32> -> vector<128x32xf32>
    %c0_4 = arith.constant 0 : index
    %c0_5 = arith.constant 0 : index
    %4 = vector.load %arg6[%c0_4, %c0_5] : memref<1x32xf32, #tpu.memory_space<vmem>>, vector<1x32xf32>
    %5 = vector.broadcast %4 : vector<1x32xf32> to vector<128x32xf32>
    %6 = arith.addf %3, %5 : vector<128x32xf32>
    %7 = vector.shape_cast %6 : vector<128x32xf32> to vector<2x64x32xf32>
    %c0_6 = arith.constant 0 : index
    %c0_7 = arith.constant 0 : index
    %c0_8 = arith.constant 0 : index
    %8 = vector.load %arg2[%c0_6, %c0_7, %c0_8] : memref<2x1x32xf32, #tpu.memory_space<vmem>>, vector<2x1x32xf32>
    %9 = vector.broadcast %8 : vector<2x1x32xf32> to vector<2x64x32xf32>
    %10 = arith.mulf %9, %7 : vector<2x64x32xf32>
    %11 = vector.shape_cast %10 : vector<2x64x32xf32> to vector<128x32xf32>
    %12 = arith.truncf %11 : vector<128x32xf32> to vector<128x32xbf16>
    %c0_9 = arith.constant 0 : index
    %c0_10 = arith.constant 0 : index
    %13 = vector.load %arg7[%c0_9, %c0_10] : memref<32x32xbf16, #tpu.memory_space<vmem>>, vector<32x32xbf16>
    %cst_11 = arith.constant dense<0.000000e+00> : vector<128x32xf32>
    %14 = tpu.matmul %12, %13, %cst_11 {dimension_numbers = #tpu.dot_dimension_numbers<[1], [0], [0], [1], [0, 0, 1, 1], [], []>} : vector<128x32xbf16>, vector<32x32xbf16>, vector<128x32xf32> -> vector<128x32xf32>
    %15 = arith.truncf %6 : vector<128x32xf32> to vector<128x32xbf16>
    %c0_12 = arith.constant 0 : index
    %c0_13 = arith.constant 0 : index
    %16 = vector.load %arg8[%c0_12, %c0_13] : memref<32x32xbf16, #tpu.memory_space<vmem>>, vector<32x32xbf16>
    %cst_14 = arith.constant dense<0.000000e+00> : vector<128x32xf32>
    %17 = tpu.matmul %15, %16, %cst_14 {dimension_numbers = #tpu.dot_dimension_numbers<[1], [0], [0], [1], [0, 0, 1, 1], [], []>} : vector<128x32xbf16>, vector<32x32xbf16>, vector<128x32xf32> -> vector<128x32xf32>
    %18 = arith.addf %14, %17 : vector<128x32xf32>
    %c0_15 = arith.constant 0 : index
    %c0_16 = arith.constant 0 : index
    %19 = vector.load %arg9[%c0_15, %c0_16] : memref<1x32xf32, #tpu.memory_space<vmem>>, vector<1x32xf32>
    %20 = vector.broadcast %19 : vector<1x32xf32> to vector<128x32xf32>
    %21 = arith.addf %18, %20 : vector<128x32xf32>
    %cst_17 = arith.constant 0.000000e+00 : f32
    %22 = vector.broadcast %cst_17 : f32 to vector<128x32xf32>
    %23 = arith.maximumf %21, %22 : vector<128x32xf32>
    %24 = vector.shape_cast %23 : vector<128x32xf32> to vector<2x64x32xf32>
    %c0_18 = arith.constant 0 : index
    %c0_19 = arith.constant 0 : index
    %c0_20 = arith.constant 0 : index
    %25 = vector.load %arg3[%c0_18, %c0_19, %c0_20] : memref<2x1x32xf32, #tpu.memory_space<vmem>>, vector<2x1x32xf32>
    %26 = vector.broadcast %25 : vector<2x1x32xf32> to vector<2x64x32xf32>
    %27 = arith.mulf %26, %24 : vector<2x64x32xf32>
    %cst_21 = arith.constant 0.000000e+00 : f32
    %28 = vector.broadcast %cst_21 : f32 to vector<2x64x32xf32>
    %29 = arith.maximumf %27, %28 : vector<2x64x32xf32>
    %c0_22 = arith.constant 0 : index
    %c0_23 = arith.constant 0 : index
    %c0_24 = arith.constant 0 : index
    %30 = vector.load %arg4[%c0_22, %c0_23, %c0_24] : memref<2x1x32xf32, #tpu.memory_space<vmem>>, vector<2x1x32xf32>
    "tpu.trace_start"() <{level = 10 : i32, message = "bqd,bnd->bqn"}> : () -> ()
    %cst_25 = arith.constant dense<0.000000e+00> : vector<2x1x64xf32>
    %31 = tpu.matmul %30, %29, %cst_25 {dimension_numbers = #tpu.dot_dimension_numbers<[2], [2], [1], [1], [0, 0, 0, 1, 1, 1], [0], [0]>} : vector<2x1x32xf32>, vector<2x64x32xf32>, vector<2x1x64xf32> -> vector<2x1x64xf32>
    "tpu.trace_stop"() : () -> ()
    %cst_26 = arith.constant dense<0xFF800000> : vector<2x1xf32>
    %32 = vector.multi_reduction <maximumf>, %31, %cst_26 [2] : vector<2x1x64xf32> to vector<2x1xf32>
    %33 = vector.shape_cast %32 : vector<2x1xf32> to vector<2x1x1xf32>
    %34 = vector.broadcast %33 : vector<2x1x1xf32> to vector<2x1x64xf32>
    %35 = arith.subf %31, %34 : vector<2x1x64xf32>
    %36 = math.exp %35 : vector<2x1x64xf32>
    %cst_27 = arith.constant dense<0.000000e+00> : vector<2x1xf32>
    %37 = vector.multi_reduction <add>, %36, %cst_27 [2] : vector<2x1x64xf32> to vector<2x1xf32>
    %38 = vector.shape_cast %37 : vector<2x1xf32> to vector<2x1x1xf32>
    %39 = tpu.reciprocal %38 {approx = true} : vector<2x1x1xf32> -> vector<2x1x1xf32>
    %40 = vector.broadcast %39 : vector<2x1x1xf32> to vector<2x1x64xf32>
    %41 = arith.mulf %36, %40 : vector<2x1x64xf32>
    %c0_28 = arith.constant 0 : index
    %c0_29 = arith.constant 0 : index
    %c0_30 = arith.constant 0 : index
    %42 = vector.load %arg11[%c0_28, %c0_29, %c0_30] : memref<2x1x64xf32, #tpu.memory_space<vmem>>, vector<2x1x64xf32>
    tpu.vector_store %arg11[%c0_28, %c0_29, %c0_30], %41 {strides = array<i32>} : memref<2x1x64xf32, #tpu.memory_space<vmem>>, vector<2x1x64xf32>,
    %43 = arith.truncf %41 : vector<2x1x64xf32> to vector<2x1x64xbf16>
    "tpu.trace_start"() <{level = 10 : i32, message = "bqn,bnd->bqd"}> : () -> ()
    %cst_31 = arith.constant dense<0.000000e+00> : vector<2x1x32xf32>
    %44 = tpu.matmul %43, %0, %cst_31 {dimension_numbers = #tpu.dot_dimension_numbers<[2], [1], [1], [2], [0, 0, 0, 1, 1, 2], [0], [0]>} : vector<2x1x64xbf16>, vector<2x64x32xbf16>, vector<2x1x32xf32> -> vector<2x1x32xf32>
    "tpu.trace_stop"() : () -> ()
    %c0_32 = arith.constant 0 : index
    %c0_33 = arith.constant 0 : index
    %c0_34 = arith.constant 0 : index
    %45 = vector.load %arg10[%c0_32, %c0_33, %c0_34] : memref<2x1x32xf32, #tpu.memory_space<vmem>>, vector<2x1x32xf32>
    tpu.vector_store %arg10[%c0_32, %c0_33, %c0_34], %44 {strides = array<i32>} : memref<2x1x32xf32, #tpu.memory_space<vmem>>, vector<2x1x32xf32>,
    return
  }
  func.func @transform_0(%arg0: i32) -> (i32, i32, i32) {
    %c0_i32 = arith.constant 0 : i32
    %c0_i32_0 = arith.constant 0 : i32
    %c0_i32_1 = arith.constant 0 : i32
    return %arg0, %c0_i32, %c0_i32_0 : i32, i32, i32
  }
  func.func @transform_1(%arg0: i32) -> (i32, i32, i32) {
    %c0_i32 = arith.constant 0 : i32
    %c0_i32_0 = arith.constant 0 : i32
    %c0_i32_1 = arith.constant 0 : i32
    return %arg0, %c0_i32, %c0_i32_0 : i32, i32, i32
  }
  func.func @transform_2(%arg0: i32) -> (i32, i32, i32) {
    %c0_i32 = arith.constant 0 : i32
    %c0_i32_0 = arith.constant 0 : i32
    %c0_i32_1 = arith.constant 0 : i32
    return %arg0, %c0_i32, %c0_i32_0 : i32, i32, i32
  }
  func.func @transform_3(%arg0: i32) -> (i32, i32, i32) {
    %c0_i32 = arith.constant 0 : i32
    %c0_i32_0 = arith.constant 0 : i32
    %c0_i32_1 = arith.constant 0 : i32
    return %arg0, %c0_i32, %c0_i32_0 : i32, i32, i32
  }
  func.func @transform_4(%arg0: i32) -> (i32, i32) {
    %c0_i32 = arith.constant 0 : i32
    %c0_i32_0 = arith.constant 0 : i32
    %c0_i32_1 = arith.constant 0 : i32
    return %c0_i32, %c0_i32_0 : i32, i32
  }
  func.func @transform_5(%arg0: i32) -> (i32, i32) {
    %c0_i32 = arith.constant 0 : i32
    %c0_i32_0 = arith.constant 0 : i32
    %c0_i32_1 = arith.constant 0 : i32
    return %c0_i32, %c0_i32_0 : i32, i32
  }
  func.func @transform_6(%arg0: i32) -> (i32, i32) {
    %c0_i32 = arith.constant 0 : i32
    %c0_i32_0 = arith.constant 0 : i32
    %c0_i32_1 = arith.constant 0 : i32
    return %c0_i32, %c0_i32_0 : i32, i32
  }
  func.func @transform_7(%arg0: i32) -> (i32, i32) {
    %c0_i32 = arith.constant 0 : i32
    %c0_i32_0 = arith.constant 0 : i32
    %c0_i32_1 = arith.constant 0 : i32
    return %c0_i32, %c0_i32_0 : i32, i32
  }
  func.func @transform_8(%arg0: i32) -> (i32, i32) {
    %c0_i32 = arith.constant 0 : i32
    %c0_i32_0 = arith.constant 0 : i32
    %c0_i32_1 = arith.constant 0 : i32
    return %c0_i32, %c0_i32_0 : i32, i32
  }
  func.func @transform_9(%arg0: i32) -> (i32, i32, i32) {
    %c0_i32 = arith.constant 0 : i32
    %c0_i32_0 = arith.constant 0 : i32
    %c0_i32_1 = arith.constant 0 : i32
    return %arg0, %c0_i32, %c0_i32_0 : i32, i32, i32
  }
  func.func @transform_10(%arg0: i32) -> (i32, i32, i32) {
    %c0_i32 = arith.constant 0 : i32
    %c0_i32_0 = arith.constant 0 : i32
    %c0_i32_1 = arith.constant 0 : i32
    return %arg0, %c0_i32, %c0_i32_0 : i32, i32, i32
  }
}

</mosaic_0001>

<llo_original>
// kernel: tpu_custom_call.1
$region0: #{tpu_custom_call.1}
  #allocation0 [shape = 'u32[]', space=smem, size = 0x4, offset = 0x4, fixed_abs, tag = 'smem constant byte address 0x4 - core index']
  #allocation1 [shape = 'u32[144,128]{1,0:T(1,128)}', space=vmem, size = 0x12000, scoped, tag = 'internal scratch']
  %s0 = inlined_call_operand.vmem [shape: bf16[2,64,32], index: 0, kind: input, shape index: {}]
  %s1 = inlined_call_operand.vmem [shape: f32[2,1,32], index: 1, kind: input, shape index: {}]
  %s2 = inlined_call_operand.vmem [shape: f32[2,1,32], index: 2, kind: input, shape index: {}]
  %s3 = inlined_call_operand.vmem [shape: f32[2,1,32], index: 3, kind: input, shape index: {}]
  %s4 = inlined_call_operand.vmem [shape: bf16[32,32], index: 4, kind: input, shape index: {}]
  %s5 = inlined_call_operand.vmem [shape: f32[1,32], index: 5, kind: input, shape index: {}]
  %s6 = inlined_call_operand.vmem [shape: bf16[32,32], index: 6, kind: input, shape index: {}]
  %s7 = inlined_call_operand.vmem [shape: bf16[32,32], index: 7, kind: input, shape index: {}]
  %s8 = inlined_call_operand.vmem [shape: f32[1,32], index: 8, kind: input, shape index: {}]
  %s9 = inlined_call_operand.hbm [shape: f32[2,1,32], index: 9, kind: output, shape index: {0}]
  %s10 = inlined_call_operand.hbm [shape: f32[2,1,64], index: 10, kind: output, shape index: {1}]
  %11 = xla_tuple %s9, %s10
  %s12 = sld [smem:[#allocation0]]
  $region54: #{tpu_custom_call.1} parent=0
    _
  %s14 = ssub.s32 1, %s12
  %s15 = scalar_select 0, %s14, %s12
  $region1: #{tpu_custom_call.1} parent=0
    #allocation2 [shape = 'u8[1024]{0}', space=vmem, size = 0x400, scoped, tag = 'output window, operand 0, single buffered']
    #allocation3 [shape = 's32[1]{0}', space=sflag, size = 0x4, scoped, tag = 'scoped memory for tpu_custom_call.1']
    #allocation4 [shape = 'u8[1024]{0}', space=vmem, size = 0x400, scoped, tag = 'output window, operand 1, single buffered']
    #allocation5 [shape = 's32[1]{0}', space=sflag, size = 0x4, scoped, tag = 'scoped memory for tpu_custom_call.1']
    %16 = vsyncpa [#allocation3], 0
    %17 = vsyncpa [#allocation5], 0
    // Predicated region
    $region2: #{tpu_custom_call.1} parent=1 // pred_check
      _
    $region3: #{tpu_custom_call.1} parent=1 // pred_check_branch
      %19 = sbr.rel (0) target = $region5
    $region4: #{tpu_custom_call.1} parent=1 // pred_region
      _
    $region5: #{tpu_custom_call.1} parent=1 // pred_fallthru
      _
    // Predicated region
    $region6: #{tpu_custom_call.1} parent=1 // pred_check
      _
    $region7: #{tpu_custom_call.1} parent=1 // pred_check_branch
      %21 = sbr.rel (0) target = $region9
    $region8: #{tpu_custom_call.1} parent=1 // pred_region
      _
    $region9: #{tpu_custom_call.1} parent=1 // pred_fallthru
      _
    // Predicated region
    $region10: #{tpu_custom_call.1} parent=1 // pred_check
      _
    $region11: #{tpu_custom_call.1} parent=1 // pred_check_branch
      %23 = sbr.rel (0) target = $region13
    $region12: #{tpu_custom_call.1} parent=1 // pred_region
      _
    $region13: #{tpu_custom_call.1} parent=1 // pred_fallthru
      _
    // Predicated region
    $region14: #{tpu_custom_call.1} parent=1 // pred_check
      _
    $region15: #{tpu_custom_call.1} parent=1 // pred_check_branch
      %25 = sbr.rel (0) target = $region17
    $region16: #{tpu_custom_call.1} parent=1 // pred_region
      _
    $region17: #{tpu_custom_call.1} parent=1 // pred_fallthru
      _
    // Predicated region
    $region18: #{tpu_custom_call.1} parent=1 // pred_check
      _
    $region19: #{tpu_custom_call.1} parent=1 // pred_check_branch
      %27 = sbr.rel (0) target = $region21
    $region20: #{tpu_custom_call.1} parent=1 // pred_region
      _
    $region21: #{tpu_custom_call.1} parent=1 // pred_fallthru
      _
    // Predicated region
    $region22: #{tpu_custom_call.1} parent=1 // pred_check
      _
    $region23: #{tpu_custom_call.1} parent=1 // pred_check_branch
      %29 = sbr.rel (0) target = $region25
    $region24: #{tpu_custom_call.1} parent=1 // pred_region
      _
    $region25: #{tpu_custom_call.1} parent=1 // pred_fallthru
      _
    // Predicated region
    $region26: #{tpu_custom_call.1} parent=1 // pred_check
      _
    $region27: #{tpu_custom_call.1} parent=1 // pred_check_branch
      %31 = sbr.rel (0) target = $region29
    $region28: #{tpu_custom_call.1} parent=1 // pred_region
      _
    $region29: #{tpu_custom_call.1} parent=1 // pred_fallthru
      _
    // Predicated region
    $region30: #{tpu_custom_call.1} parent=1 // pred_check
      _
    $region31: #{tpu_custom_call.1} parent=1 // pred_check_branch
      %33 = sbr.rel (0) target = $region33
    $region32: #{tpu_custom_call.1} parent=1 // pred_region
      _
    $region33: #{tpu_custom_call.1} parent=1 // pred_fallthru
      _
    // Predicated region
    $region34: #{tpu_custom_call.1} parent=1 // pred_check
      _
    $region35: #{tpu_custom_call.1} parent=1 // pred_check_branch
      %35 = sbr.rel (0) target = $region37
    $region36: #{tpu_custom_call.1} parent=1 // pred_region
      _
    $region37: #{tpu_custom_call.1} parent=1 // pred_fallthru
      _
    %v37 = vld [vmem:[%s0] sm:$0xf]
    %v38 = vld [vmem:[%s0 + $0x4] sm:$0xf]
    %v39 = vld [vmem:[%s0 + $0x8] sm:$0xf]
    %v40 = vld [vmem:[%s0 + $0xc] sm:$0xf]
    %v41 = vld [vmem:[%s0 + $0x10] sm:$0xf]
    %v42 = vld [vmem:[%s0 + $0x14] sm:$0xf]
    %v43 = vld [vmem:[%s0 + $0x18] sm:$0xf]
    %v44 = vld [vmem:[%s0 + $0x1c] sm:$0xf]
    %v45 = vld [vmem:[%s0 + $0x20] sm:$0xf]
    %v46 = vld [vmem:[%s0 + $0x24] sm:$0xf]
    %v47 = vld [vmem:[%s0 + $0x28] sm:$0xf]
    %v48 = vld [vmem:[%s0 + $0x2c] sm:$0xf]
    %v49 = vld [vmem:[%s0 + $0x30] sm:$0xf]
    %v50 = vld [vmem:[%s0 + $0x34] sm:$0xf]
    %v51 = vld [vmem:[%s0 + $0x38] sm:$0xf]
    %v52 = vld [vmem:[%s0 + $0x3c] sm:$0xf]
    %v53 = vld [vmem:[%s4] sm:$0xf]
    %v54 = vld [vmem:[%s4 + $0x4] sm:$0xf]
    %v55 = vld [vmem:[%s4 + $0x8] sm:$0xf]
    %v56 = vld [vmem:[%s4 + $0xc] sm:$0xf]
    %v57 = vld [vmem:[%s5] sm:$0x1]
    %v59 = vlaneseq
    %v60 = vshrl.u32 %v59, 7
    %v61 = vsub.s32 0, %v60
    %v62 = vrot.slane %v57, %v61
    %v80 = vunpack.c.l.b16 %v37
    %v81 = vunpack.c.l.b16 %v38
    %v82 = vunpack.c.l.b16 %v39
    %v83 = vunpack.c.l.b16 %v40
    %v84 = vunpack.c.l.b16 %v41
    %v85 = vunpack.c.l.b16 %v42
    %v86 = vunpack.c.l.b16 %v43
    %v87 = vunpack.c.l.b16 %v44
    %v88 = vunpack.c.l.b16 %v45
    %v89 = vunpack.c.l.b16 %v46
    %v90 = vunpack.c.l.b16 %v47
    %v91 = vunpack.c.l.b16 %v48
    %v92 = vunpack.c.l.b16 %v49
    %v93 = vunpack.c.l.b16 %v50
    %v94 = vunpack.c.l.b16 %v51
    %v95 = vunpack.c.l.b16 %v52
    %v96 = vpack.c.b16 %v81, %v80
    %v97 = vpack.c.b16 %v83, %v82
    %v98 = vpack.c.b16 %v85, %v84
    %v99 = vpack.c.b16 %v87, %v86
    %v100 = vpack.c.b16 %v89, %v88
    %v101 = vpack.c.b16 %v91, %v90
    %v102 = vpack.c.b16 %v93, %v92
    %v103 = vpack.c.b16 %v95, %v94
    %v108 = vunpack.c.l.b16 %v53
    %v109 = vunpack.c.l.b16 %v54
    %v110 = vunpack.c.l.b16 %v55
    %v111 = vunpack.c.l.b16 %v56
    %v112 = vpack.c.b16 %v109, %v108
    %v113 = vpack.c.b16 %v111, %v110
    %vm116 = vcmask 261120
    %v118 = vsel %vm116, %v96, 0
    %v121 = vsel %vm116, %v97, 0
    %v124 = vsel %vm116, %v98, 0
    %v127 = vsel %vm116, %v99, 0
    %v130 = vsel %vm116, %v100, 0
    %v133 = vsel %vm116, %v101, 0
    %v136 = vsel %vm116, %v102, 0
    %v139 = vsel %vm116, %v103, 0
    %141 = vmatprep.subr.bf16.mxu0 0
    %142 = vmatpush1.bf16.msra.mxu0 %v112
    %143 = vmatprep.subr.bf16.mxu0 0
    %144 = vmatpush1.bf16.msra.mxu0 %v113
    %145 = vmatprep.subr.bf16.mxu0 0
    %146 = vmatpush1.bf16.msra.mxu0 0
    %147 = vmatprep.subr.bf16.mxu0 0
    %148 = vmatpush1.bf16.msra.mxu0 0
    %149 = vmatprep.subr.bf16.mxu0 0
    %150 = vmatpush1.bf16.msra.mxu0 0
    %151 = vmatprep.subr.bf16.mxu0 0
    %152 = vmatpush1.bf16.msra.mxu0 0
    %153 = vmatprep.subr.bf16.mxu0 0
    %154 = vmatpush1.bf16.msra.mxu0 0
    %155 = vmatprep.subr.bf16.mxu0 0
    %156 = vmatpush1.bf16.msra.mxu0 0
    %157 = vmatprep.subr.bf16.mxu0 0
    %158 = vmatpush1.bf16.msra.mxu0 0
    %159 = vmatprep.subr.bf16.mxu0 0
    %160 = vmatpush1.bf16.msra.mxu0 0
    %161 = vmatprep.subr.bf16.mxu0 0
    %162 = vmatpush1.bf16.msra.mxu0 0
    %163 = vmatprep.subr.bf16.mxu0 0
    %164 = vmatpush1.bf16.msra.mxu0 0
    %165 = vmatprep.subr.bf16.mxu0 0
    %166 = vmatpush1.bf16.msra.mxu0 0
    %167 = vmatprep.subr.bf16.mxu0 0
    %168 = vmatpush1.bf16.msra.mxu0 0
    %169 = vmatprep.subr.bf16.mxu0 0
    %170 = vmatpush1.bf16.msra.mxu0 0
    %171 = vmatprep.subr.bf16.mxu0 0
    %172 = vmatpush1.bf16.msra.mxu0 0
    %173 = vmatprep.mubr.bf16.mxu0 0
    %174 = vmatmul.mubr.bf16.gmra.mrb[0].mxu0 %v118
    %v175 = vpop.f32.mrb[0].mxu0
    %v176 = vadd.f32 %v62, %v175
    %v177 = vpop.f32.mrb[0].mxu0
    %v178 = vpop.f32.mrb[0].mxu0
    %v179 = vadd.f32 %v62, %v178
    %v180 = vpop.f32.mrb[0].mxu0
    %181 = vmatprep.mubr.bf16.mxu0 0
    %182 = vmatmul.mubr.bf16.gmra.mrb[0].mxu0 %v121
    %v183 = vpop.f32.mrb[0].mxu0
    %v184 = vadd.f32 %v62, %v183
    %v185 = vpop.f32.mrb[0].mxu0
    %v186 = vpop.f32.mrb[0].mxu0
    %v187 = vadd.f32 %v62, %v186
    %v188 = vpop.f32.mrb[0].mxu0
    %189 = vmatprep.mubr.bf16.mxu0 0
    %190 = vmatmul.mubr.bf16.gmra.mrb[0].mxu0 %v124
    %v191 = vpop.f32.mrb[0].mxu0
    %v192 = vadd.f32 %v62, %v191
    %v193 = vpop.f32.mrb[0].mxu0
    %v194 = vpop.f32.mrb[0].mxu0
    %v195 = vadd.f32 %v62, %v194
    %v196 = vpop.f32.mrb[0].mxu0
    %197 = vmatprep.mubr.bf16.mxu0 0
    %198 = vmatmul.mubr.bf16.gmra.mrb[0].mxu0 %v127
    %v199 = vpop.f32.mrb[0].mxu0
    %v200 = vadd.f32 %v62, %v199
    %v201 = vpop.f32.mrb[0].mxu0
    %v202 = vpop.f32.mrb[0].mxu0
    %v203 = vadd.f32 %v62, %v202
    %v204 = vpop.f32.mrb[0].mxu0
    %205 = vmatprep.mubr.bf16.mxu0 0
    %206 = vmatmul.mubr.bf16.gmra.mrb[0].mxu0 %v130
    %v207 = vpop.f32.mrb[0].mxu0
    %v208 = vadd.f32 %v62, %v207
    %v209 = vpop.f32.mrb[0].mxu0
    %v210 = vpop.f32.mrb[0].mxu0
    %v211 = vadd.f32 %v62, %v210
    %v212 = vpop.f32.mrb[0].mxu0
    %213 = vmatprep.mubr.bf16.mxu0 0
    %214 = vmatmul.mubr.bf16.gmra.mrb[0].mxu0 %v133
    %v215 = vpop.f32.mrb[0].mxu0
    %v216 = vadd.f32 %v62, %v215
    %v217 = vpop.f32.mrb[0].mxu0
    %v218 = vpop.f32.mrb[0].mxu0
    %v219 = vadd.f32 %v62, %v218
    %v220 = vpop.f32.mrb[0].mxu0
    %221 = vmatprep.mubr.bf16.mxu0 0
    %222 = vmatmul.mubr.bf16.gmra.mrb[0].mxu0 %v136
    %v223 = vpop.f32.mrb[0].mxu0
    %v224 = vadd.f32 %v62, %v223
    %v225 = vpop.f32.mrb[0].mxu0
    %v226 = vpop.f32.mrb[0].mxu0
    %v227 = vadd.f32 %v62, %v226
    %v228 = vpop.f32.mrb[0].mxu0
    %229 = vmatprep.mubr.bf16.mxu0 0
    %230 = vmatmul.mubr.bf16.gmra.mrb[0].mxu0 %v139
    %v231 = vpop.f32.mrb[0].mxu0
    %v232 = vadd.f32 %v62, %v231
    %v233 = vpop.f32.mrb[0].mxu0
    %v234 = vpop.f32.mrb[0].mxu0
    %v235 = vadd.f32 %v62, %v234
    %v236 = vpop.f32.mrb[0].mxu0
    %237 = vdwg.mxu0
    %v238 = vld [vmem:[%s1] sm:$0x1]
    %v239 = vld [vmem:[%s1 + $0x1] sm:$0x1]
    %v242 = vlaneseq
    %v243 = vshrl.u32 %v242, 7
    %v244 = vsub.s32 0, %v243
    %v245 = vrot.slane %v238, %v244
    %v246 = vlaneseq
    %v247 = vshrl.u32 %v246, 7
    %v248 = vsub.s32 0, %v247
    %v249 = vrot.slane %v239, %v248
    %v252 = vmul.f32 %v245, %v176
    %v253 = vmul.f32 %v245, %v179
    %v254 = vmul.f32 %v245, %v184
    %v255 = vmul.f32 %v245, %v187
    %v256 = vmul.f32 %v245, %v192
    %v257 = vmul.f32 %v245, %v195
    %v258 = vmul.f32 %v245, %v200
    %v259 = vmul.f32 %v245, %v203
    %v260 = vmul.f32 %v249, %v208
    %v261 = vmul.f32 %v249, %v211
    %v262 = vmul.f32 %v249, %v216
    %v263 = vmul.f32 %v249, %v219
    %v264 = vmul.f32 %v249, %v224
    %v265 = vmul.f32 %v249, %v227
    %v266 = vmul.f32 %v249, %v232
    %v267 = vmul.f32 %v249, %v235
    %v268 = vpack.c.bf16 %v253, %v252
    %v269 = vpack.c.bf16 %v255, %v254
    %v270 = vpack.c.bf16 %v257, %v256
    %v271 = vpack.c.bf16 %v259, %v258
    %v272 = vpack.c.bf16 %v261, %v260
    %v273 = vpack.c.bf16 %v263, %v262
    %v274 = vpack.c.bf16 %v265, %v264
    %v275 = vpack.c.bf16 %v267, %v266
    %v276 = vld [vmem:[%s6] sm:$0xf]
    %v277 = vld [vmem:[%s6 + $0x4] sm:$0xf]
    %v278 = vld [vmem:[%s6 + $0x8] sm:$0xf]
    %v279 = vld [vmem:[%s6 + $0xc] sm:$0xf]
    %v280 = vpack.c.bf16 %v179, %v176
    %v281 = vpack.c.bf16 %v187, %v184
    %v282 = vpack.c.bf16 %v195, %v192
    %v283 = vpack.c.bf16 %v203, %v200
    %v284 = vpack.c.bf16 %v211, %v208
    %v285 = vpack.c.bf16 %v219, %v216
    %v286 = vpack.c.bf16 %v227, %v224
    %v287 = vpack.c.bf16 %v235, %v232
    %v288 = vld [vmem:[%s7] sm:$0xf]
    %v289 = vld [vmem:[%s7 + $0x4] sm:$0xf]
    %v290 = vld [vmem:[%s7 + $0x8] sm:$0xf]
    %v291 = vld [vmem:[%s7 + $0xc] sm:$0xf]
    %v296 = vunpack.c.l.b16 %v288
    %v297 = vunpack.c.l.b16 %v289
    %v298 = vunpack.c.l.b16 %v290
    %v299 = vunpack.c.l.b16 %v291
    %v300 = vpack.c.b16 %v297, %v296
    %v301 = vpack.c.b16 %v299, %v298
    %v305 = vsel %vm116, %v280, 0
    %v308 = vsel %vm116, %v281, 0
    %v311 = vsel %vm116, %v282, 0
    %v314 = vsel %vm116, %v283, 0
    %v317 = vsel %vm116, %v284, 0
    %v320 = vsel %vm116, %v285, 0
    %v323 = vsel %vm116, %v286, 0
    %v326 = vsel %vm116, %v287, 0
    %328 = vmatprep.subr.bf16.mxu0 0
    %329 = vmatpush1.bf16.msra.mxu0 %v300
    %330 = vmatprep.subr.bf16.mxu0 0
    %331 = vmatpush1.bf16.msra.mxu0 %v301
    %332 = vmatprep.subr.bf16.mxu0 0
    %333 = vmatpush1.bf16.msra.mxu0 0
    %334 = vmatprep.subr.bf16.mxu0 0
    %335 = vmatpush1.bf16.msra.mxu0 0
    %336 = vmatprep.subr.bf16.mxu0 0
    %337 = vmatpush1.bf16.msra.mxu0 0
    %338 = vmatprep.subr.bf16.mxu0 0
    %339 = vmatpush1.bf16.msra.mxu0 0
    %340 = vmatprep.subr.bf16.mxu0 0
    %341 = vmatpush1.bf16.msra.mxu0 0
    %342 = vmatprep.subr.bf16.mxu0 0
    %343 = vmatpush1.bf16.msra.mxu0 0
    %344 = vmatprep.subr.bf16.mxu0 0
    %345 = vmatpush1.bf16.msra.mxu0 0
    %346 = vmatprep.subr.bf16.mxu0 0
    %347 = vmatpush1.bf16.msra.mxu0 0
    %348 = vmatprep.subr.bf16.mxu0 0
    %349 = vmatpush1.bf16.msra.mxu0 0
    %350 = vmatprep.subr.bf16.mxu0 0
    %351 = vmatpush1.bf16.msra.mxu0 0
    %352 = vmatprep.subr.bf16.mxu0 0
    %353 = vmatpush1.bf16.msra.mxu0 0
    %354 = vmatprep.subr.bf16.mxu0 0
    %355 = vmatpush1.bf16.msra.mxu0 0
    %356 = vmatprep.subr.bf16.mxu0 0
    %357 = vmatpush1.bf16.msra.mxu0 0
    %358 = vmatprep.subr.bf16.mxu0 0
    %359 = vmatpush1.bf16.msra.mxu0 0
    %360 = vmatprep.mubr.bf16.mxu0 0
    %361 = vmatmul.mubr.bf16.gmra.mrb[0].mxu0 %v305
    %v362 = vpop.f32.mrb[0].mxu0
    %v363 = vadd.f32 0.0, %v362
    %v364 = vpop.f32.mrb[0].mxu0
    %v365 = vpop.f32.mrb[0].mxu0
    %v366 = vadd.f32 0.0, %v365
    %v367 = vpop.f32.mrb[0].mxu0
    %368 = vmatprep.mubr.bf16.mxu0 0
    %369 = vmatmul.mubr.bf16.gmra.mrb[0].mxu0 %v308
    %v370 = vpop.f32.mrb[0].mxu0
    %v371 = vadd.f32 0.0, %v370
    %v372 = vpop.f32.mrb[0].mxu0
    %v373 = vpop.f32.mrb[0].mxu0
    %v374 = vadd.f32 0.0, %v373
    %v375 = vpop.f32.mrb[0].mxu0
    %376 = vmatprep.mubr.bf16.mxu0 0
    %377 = vmatmul.mubr.bf16.gmra.mrb[0].mxu0 %v311
    %v378 = vpop.f32.mrb[0].mxu0
    %v379 = vadd.f32 0.0, %v378
    %v380 = vpop.f32.mrb[0].mxu0
    %v381 = vpop.f32.mrb[0].mxu0
    %v382 = vadd.f32 0.0, %v381
    %v383 = vpop.f32.mrb[0].mxu0
    %384 = vmatprep.mubr.bf16.mxu0 0
    %385 = vmatmul.mubr.bf16.gmra.mrb[0].mxu0 %v314
    %v386 = vpop.f32.mrb[0].mxu0
    %v387 = vadd.f32 0.0, %v386
    %v388 = vpop.f32.mrb[0].mxu0
    %v389 = vpop.f32.mrb[0].mxu0
    %v390 = vadd.f32 0.0, %v389
    %v391 = vpop.f32.mrb[0].mxu0
    %392 = vmatprep.mubr.bf16.mxu0 0
    %393 = vmatmul.mubr.bf16.gmra.mrb[0].mxu0 %v317
    %v394 = vpop.f32.mrb[0].mxu0
    %v395 = vadd.f32 0.0, %v394
    %v396 = vpop.f32.mrb[0].mxu0
    %v397 = vpop.f32.mrb[0].mxu0
    %v398 = vadd.f32 0.0, %v397
    %v399 = vpop.f32.mrb[0].mxu0
    %400 = vmatprep.mubr.bf16.mxu0 0
    %401 = vmatmul.mubr.bf16.gmra.mrb[0].mxu0 %v320
    %v402 = vpop.f32.mrb[0].mxu0
    %v403 = vadd.f32 0.0, %v402
    %v404 = vpop.f32.mrb[0].mxu0
    %v405 = vpop.f32.mrb[0].mxu0
    %v406 = vadd.f32 0.0, %v405
    %v407 = vpop.f32.mrb[0].mxu0
    %408 = vmatprep.mubr.bf16.mxu0 0
    %409 = vmatmul.mubr.bf16.gmra.mrb[0].mxu0 %v323
    %v410 = vpop.f32.mrb[0].mxu0
    %v411 = vadd.f32 0.0, %v410
    %v412 = vpop.f32.mrb[0].mxu0
    %v413 = vpop.f32.mrb[0].mxu0
    %v414 = vadd.f32 0.0, %v413
    %v415 = vpop.f32.mrb[0].mxu0
    %416 = vmatprep.mubr.bf16.mxu0 0
    %417 = vmatmul.mubr.bf16.gmra.mrb[0].mxu0 %v326
    %v418 = vpop.f32.mrb[0].mxu0
    %v419 = vadd.f32 0.0, %v418
    %v420 = vpop.f32.mrb[0].mxu0
    %v421 = vpop.f32.mrb[0].mxu0
    %v422 = vadd.f32 0.0, %v421
    %v423 = vpop.f32.mrb[0].mxu0
    %424 = vdwg.mxu0
    %v429 = vunpack.c.l.b16 %v276
    %v430 = vunpack.c.l.b16 %v277
    %v431 = vunpack.c.l.b16 %v278
    %v432 = vunpack.c.l.b16 %v279
    %v433 = vpack.c.b16 %v430, %v429
    %v434 = vpack.c.b16 %v432, %v431
    %v438 = vsel %vm116, %v268, 0
    %v441 = vsel %vm116, %v269, 0
    %v444 = vsel %vm116, %v270, 0
    %v447 = vsel %vm116, %v271, 0
    %v450 = vsel %vm116, %v272, 0
    %v453 = vsel %vm116, %v273, 0
    %v456 = vsel %vm116, %v274, 0
    %v459 = vsel %vm116, %v275, 0
    %461 = vmatprep.subr.bf16.mxu0 0
    %462 = vmatpush1.bf16.msra.mxu0 %v433
    %463 = vmatprep.subr.bf16.mxu0 0
    %464 = vmatpush1.bf16.msra.mxu0 %v434
    %465 = vmatprep.subr.bf16.mxu0 0
    %466 = vmatpush1.bf16.msra.mxu0 0
    %467 = vmatprep.subr.bf16.mxu0 0
    %468 = vmatpush1.bf16.msra.mxu0 0
    %469 = vmatprep.subr.bf16.mxu0 0
    %470 = vmatpush1.bf16.msra.mxu0 0
    %471 = vmatprep.subr.bf16.mxu0 0
    %472 = vmatpush1.bf16.msra.mxu0 0
    %473 = vmatprep.subr.bf16.mxu0 0
    %474 = vmatpush1.bf16.msra.mxu0 0
    %475 = vmatprep.subr.bf16.mxu0 0
    %476 = vmatpush1.bf16.msra.mxu0 0
    %477 = vmatprep.subr.bf16.mxu0 0
    %478 = vmatpush1.bf16.msra.mxu0 0
    %479 = vmatprep.subr.bf16.mxu0 0
    %480 = vmatpush1.bf16.msra.mxu0 0
    %481 = vmatprep.subr.bf16.mxu0 0
    %482 = vmatpush1.bf16.msra.mxu0 0
    %483 = vmatprep.subr.bf16.mxu0 0
    %484 = vmatpush1.bf16.msra.mxu0 0
    %485 = vmatprep.subr.bf16.mxu0 0
    %486 = vmatpush1.bf16.msra.mxu0 0
    %487 = vmatprep.subr.bf16.mxu0 0
    %488 = vmatpush1.bf16.msra.mxu0 0
    %489 = vmatprep.subr.bf16.mxu0 0
    %490 = vmatpush1.bf16.msra.mxu0 0
    %491 = vmatprep.subr.bf16.mxu0 0
    %492 = vmatpush1.bf16.msra.mxu0 0
    %493 = vmatprep.mubr.bf16.mxu0 0
    %494 = vmatmul.mubr.bf16.gmra.mrb[0].mxu0 %v438
    %v495 = vpop.f32.mrb[0].mxu0
    %v496 = vadd.f32 %v363, %v495
    %v497 = vpop.f32.mrb[0].mxu0
    %v498 = vpop.f32.mrb[0].mxu0
    %v499 = vadd.f32 %v366, %v498
    %v500 = vpop.f32.mrb[0].mxu0
    %501 = vmatprep.mubr.bf16.mxu0 0
    %502 = vmatmul.mubr.bf16.gmra.mrb[0].mxu0 %v441
    %v503 = vpop.f32.mrb[0].mxu0
    %v504 = vadd.f32 %v371, %v503
    %v505 = vpop.f32.mrb[0].mxu0
    %v506 = vpop.f32.mrb[0].mxu0
    %v507 = vadd.f32 %v374, %v506
    %v508 = vpop.f32.mrb[0].mxu0
    %509 = vmatprep.mubr.bf16.mxu0 0
    %510 = vmatmul.mubr.bf16.gmra.mrb[0].mxu0 %v444
    %v511 = vpop.f32.mrb[0].mxu0
    %v512 = vadd.f32 %v379, %v511
    %v513 = vpop.f32.mrb[0].mxu0
    %v514 = vpop.f32.mrb[0].mxu0
    %v515 = vadd.f32 %v382, %v514
    %v516 = vpop.f32.mrb[0].mxu0
    %517 = vmatprep.mubr.bf16.mxu0 0
    %518 = vmatmul.mubr.bf16.gmra.mrb[0].mxu0 %v447
    %v519 = vpop.f32.mrb[0].mxu0
    %v520 = vadd.f32 %v387, %v519
    %v521 = vpop.f32.mrb[0].mxu0
    %v522 = vpop.f32.mrb[0].mxu0
    %v523 = vadd.f32 %v390, %v522
    %v524 = vpop.f32.mrb[0].mxu0
    %525 = vmatprep.mubr.bf16.mxu0 0
    %526 = vmatmul.mubr.bf16.gmra.mrb[0].mxu0 %v450
    %v527 = vpop.f32.mrb[0].mxu0
    %v528 = vadd.f32 %v395, %v527
    %v529 = vpop.f32.mrb[0].mxu0
    %v530 = vpop.f32.mrb[0].mxu0
    %v531 = vadd.f32 %v398, %v530
    %v532 = vpop.f32.mrb[0].mxu0
    %533 = vmatprep.mubr.bf16.mxu0 0
    %534 = vmatmul.mubr.bf16.gmra.mrb[0].mxu0 %v453
    %v535 = vpop.f32.mrb[0].mxu0
    %v536 = vadd.f32 %v403, %v535
    %v537 = vpop.f32.mrb[0].mxu0
    %v538 = vpop.f32.mrb[0].mxu0
    %v539 = vadd.f32 %v406, %v538
    %v540 = vpop.f32.mrb[0].mxu0
    %541 = vmatprep.mubr.bf16.mxu0 0
    %542 = vmatmul.mubr.bf16.gmra.mrb[0].mxu0 %v456
    %v543 = vpop.f32.mrb[0].mxu0
    %v544 = vadd.f32 %v411, %v543
    %v545 = vpop.f32.mrb[0].mxu0
    %v546 = vpop.f32.mrb[0].mxu0
    %v547 = vadd.f32 %v414, %v546
    %v548 = vpop.f32.mrb[0].mxu0
    %549 = vmatprep.mubr.bf16.mxu0 0
    %550 = vmatmul.mubr.bf16.gmra.mrb[0].mxu0 %v459
    %v551 = vpop.f32.mrb[0].mxu0
    %v552 = vadd.f32 %v419, %v551
    %v553 = vpop.f32.mrb[0].mxu0
    %v554 = vpop.f32.mrb[0].mxu0
    %v555 = vadd.f32 %v422, %v554
    %v556 = vpop.f32.mrb[0].mxu0
    %557 = vdwg.mxu0
    %v558 = vld [vmem:[%s8] sm:$0x1]
    %v560 = vlaneseq
    %v561 = vshrl.u32 %v560, 7
    %v562 = vsub.s32 0, %v561
    %v563 = vrot.slane %v558, %v562
    %v565 = vadd.f32 %v496, %v563
    %v566 = vadd.f32 %v499, %v563
    %v567 = vadd.f32 %v504, %v563
    %v568 = vadd.f32 %v507, %v563
    %v569 = vadd.f32 %v512, %v563
    %v570 = vadd.f32 %v515, %v563
    %v571 = vadd.f32 %v520, %v563
    %v572 = vadd.f32 %v523, %v563
    %v573 = vadd.f32 %v528, %v563
    %v574 = vadd.f32 %v531, %v563
    %v575 = vadd.f32 %v536, %v563
    %v576 = vadd.f32 %v539, %v563
    %v577 = vadd.f32 %v544, %v563
    %v578 = vadd.f32 %v547, %v563
    %v579 = vadd.f32 %v552, %v563
    %v580 = vadd.f32 %v555, %v563
    %v581 = vmax.f32 %v565, 0.0
    %v582 = vmax.f32 %v566, 0.0
    %v583 = vmax.f32 %v567, 0.0
    %v584 = vmax.f32 %v568, 0.0
    %v585 = vmax.f32 %v569, 0.0
    %v586 = vmax.f32 %v570, 0.0
    %v587 = vmax.f32 %v571, 0.0
    %v588 = vmax.f32 %v572, 0.0
    %v589 = vmax.f32 %v573, 0.0
    %v590 = vmax.f32 %v574, 0.0
    %v591 = vmax.f32 %v575, 0.0
    %v592 = vmax.f32 %v576, 0.0
    %v593 = vmax.f32 %v577, 0.0
    %v594 = vmax.f32 %v578, 0.0
    %v595 = vmax.f32 %v579, 0.0
    %v596 = vmax.f32 %v580, 0.0
    %v597 = vld [vmem:[%s2] sm:$0x1]
    %v598 = vld [vmem:[%s2 + $0x1] sm:$0x1]
    %v601 = vlaneseq
    %v602 = vshrl.u32 %v601, 7
    %v603 = vsub.s32 0, %v602
    %v604 = vrot.slane %v597, %v603
    %v605 = vlaneseq
    %v606 = vshrl.u32 %v605, 7
    %v607 = vsub.s32 0, %v606
    %v608 = vrot.slane %v598, %v607
    %v611 = vmul.f32 %v604, %v581
    %v612 = vmul.f32 %v604, %v582
    %v613 = vmul.f32 %v604, %v583
    %v614 = vmul.f32 %v604, %v584
    %v615 = vmul.f32 %v604, %v585
    %v616 = vmul.f32 %v604, %v586
    %v617 = vmul.f32 %v604, %v587
    %v618 = vmul.f32 %v604, %v588
    %v619 = vmul.f32 %v608, %v589
    %v620 = vmul.f32 %v608, %v590
    %v621 = vmul.f32 %v608, %v591
    %v622 = vmul.f32 %v608, %v592
    %v623 = vmul.f32 %v608, %v593
    %v624 = vmul.f32 %v608, %v594
    %v625 = vmul.f32 %v608, %v595
    %v626 = vmul.f32 %v608, %v596
    %v627 = vmax.f32 %v611, 0.0
    %v628 = vmax.f32 %v612, 0.0
    %v629 = vmax.f32 %v613, 0.0
    %v630 = vmax.f32 %v614, 0.0
    %v631 = vmax.f32 %v615, 0.0
    %v632 = vmax.f32 %v616, 0.0
    %v633 = vmax.f32 %v617, 0.0
    %v634 = vmax.f32 %v618, 0.0
    %v635 = vmax.f32 %v619, 0.0
    %v636 = vmax.f32 %v620, 0.0
    %v637 = vmax.f32 %v621, 0.0
    %v638 = vmax.f32 %v622, 0.0
    %v639 = vmax.f32 %v623, 0.0
    %v640 = vmax.f32 %v624, 0.0
    %v641 = vmax.f32 %v625, 0.0
    %v642 = vmax.f32 %v626, 0.0
    %v643 = vld [vmem:[%s3] sm:$0x1]
    %v644 = vld [vmem:[%s3 + $0x1] sm:$0x1]
    %v646 = vsel %vm116, %v643, 0
    %v649 = vsel %vm116, %v627, 0
    %v652 = vsel %vm116, %v628, 0
    %v655 = vsel %vm116, %v629, 0
    %v658 = vsel %vm116, %v630, 0
    %v661 = vsel %vm116, %v631, 0
    %v664 = vsel %vm116, %v632, 0
    %v667 = vsel %vm116, %v633, 0
    %v670 = vsel %vm116, %v634, 0
    %672 = vmatprep.subr.mxu0 0.0
    %673 = vmatpush1.xpose.msra.mxu0 %v649
    %674 = vmatprep.subr.mxu0 0.0
    %675 = vmatpush1.xpose.msra.mxu0 %v652
    %676 = vmatprep.subr.mxu0 0.0
    %677 = vmatpush1.xpose.msra.mxu0 %v655
    %678 = vmatprep.subr.mxu0 0.0
    %679 = vmatpush1.xpose.msra.mxu0 %v658
    %680 = vmatprep.subr.mxu0 0.0
    %681 = vmatpush1.xpose.msra.mxu0 %v661
    %682 = vmatprep.subr.mxu0 0.0
    %683 = vmatpush1.xpose.msra.mxu0 %v664
    %684 = vmatprep.subr.mxu0 0.0
    %685 = vmatpush1.xpose.msra.mxu0 %v667
    %686 = vmatprep.subr.mxu0 0.0
    %687 = vmatpush1.xpose.msra.mxu0 %v670
    %688 = vmatprep.subr.mxu0 0.0
    %689 = vmatpush1.xpose.msra.mxu0 0.0
    %690 = vmatprep.subr.mxu0 0.0
    %691 = vmatpush1.xpose.msra.mxu0 0.0
    %692 = vmatprep.subr.mxu0 0.0
    %693 = vmatpush1.xpose.msra.mxu0 0.0
    %694 = vmatprep.subr.mxu0 0.0
    %695 = vmatpush1.xpose.msra.mxu0 0.0
    %696 = vmatprep.subr.mxu0 0.0
    %697 = vmatpush1.xpose.msra.mxu0 0.0
    %698 = vmatprep.subr.mxu0 0.0
    %699 = vmatpush1.xpose.msra.mxu0 0.0
    %700 = vmatprep.subr.mxu0 0.0
    %701 = vmatpush1.xpose.msra.mxu0 0.0
    %702 = vmatprep.subr.mxu0 0.0
    %703 = vmatpush1.xpose.msra.mxu0 0.0
    %704 = vmatprep.subr.mxu0 0.0
    %705 = vmatpush1.xpose.msra.mxu0 0.0
    %706 = vmatprep.subr.mxu0 0.0
    %707 = vmatpush1.xpose.msra.mxu0 0.0
    %708 = vmatprep.subr.mxu0 0.0
    %709 = vmatpush1.xpose.msra.mxu0 0.0
    %710 = vmatprep.subr.mxu0 0.0
    %711 = vmatpush1.xpose.msra.mxu0 0.0
    %712 = vmatprep.subr.mxu0 0.0
    %713 = vmatpush1.xpose.msra.mxu0 0.0
    %714 = vmatprep.subr.mxu0 0.0
    %715 = vmatpush1.xpose.msra.mxu0 0.0
    %716 = vmatprep.subr.mxu0 0.0
    %717 = vmatpush1.xpose.msra.mxu0 0.0
    %718 = vmatprep.subr.mxu0 0.0
    %719 = vmatpush1.xpose.msra.mxu0 0.0
    %720 = vmatprep.subr.mxu0 0.0
    %721 = vmatpush1.xpose.msra.mxu0 0.0
    %722 = vmatprep.subr.mxu0 0.0
    %723 = vmatpush1.xpose.msra.mxu0 0.0
    %724 = vmatprep.subr.mxu0 0.0
    %725 = vmatpush1.xpose.msra.mxu0 0.0
    %726 = vmatprep.subr.mxu0 0.0
    %727 = vmatpush1.xpose.msra.mxu0 0.0
    %728 = vmatprep.subr.mxu0 0.0
    %729 = vmatpush1.xpose.msra.mxu0 0.0
    %730 = vmatprep.subr.mxu0 0.0
    %731 = vmatpush1.xpose.msra.mxu0 0.0
    %732 = vmatprep.subr.mxu0 0.0
    %733 = vmatpush1.xpose.msra.mxu0 0.0
    %734 = vmatprep.subr.mxu0 0.0
    %735 = vmatpush1.xpose.msra.mxu0 0.0
    %736 = vmatprep.mubr.f32.mxu0 0.0
    %737 = vmatmul.mubr.f32.gmra.mrb[0].mxu0 %v646
    %v738 = vpop.f32.mrb[0].mxu0
    %v739 = vadd.f32 0.0, %v738
    %v740 = vpop.f32.mrb[0].mxu0
    %741 = vdwg.mxu0
    %v743 = vsel %vm116, %v644, 0
    %v746 = vsel %vm116, %v635, 0
    %v749 = vsel %vm116, %v636, 0
    %v752 = vsel %vm116, %v637, 0
    %v755 = vsel %vm116, %v638, 0
    %v758 = vsel %vm116, %v639, 0
    %v761 = vsel %vm116, %v640, 0
    %v764 = vsel %vm116, %v641, 0
    %v767 = vsel %vm116, %v642, 0
    %769 = vmatprep.subr.mxu0 0.0
    %770 = vmatpush1.xpose.msra.mxu0 %v746
    %771 = vmatprep.subr.mxu0 0.0
    %772 = vmatpush1.xpose.msra.mxu0 %v749
    %773 = vmatprep.subr.mxu0 0.0
    %774 = vmatpush1.xpose.msra.mxu0 %v752
    %775 = vmatprep.subr.mxu0 0.0
    %776 = vmatpush1.xpose.msra.mxu0 %v755
    %777 = vmatprep.subr.mxu0 0.0
    %778 = vmatpush1.xpose.msra.mxu0 %v758
    %779 = vmatprep.subr.mxu0 0.0
    %780 = vmatpush1.xpose.msra.mxu0 %v761
    %781 = vmatprep.subr.mxu0 0.0
    %782 = vmatpush1.xpose.msra.mxu0 %v764
    %783 = vmatprep.subr.mxu0 0.0
    %784 = vmatpush1.xpose.msra.mxu0 %v767
    %785 = vmatprep.subr.mxu0 0.0
    %786 = vmatpush1.xpose.msra.mxu0 0.0
    %787 = vmatprep.subr.mxu0 0.0
    %788 = vmatpush1.xpose.msra.mxu0 0.0
    %789 = vmatprep.subr.mxu0 0.0
    %790 = vmatpush1.xpose.msra.mxu0 0.0
    %791 = vmatprep.subr.mxu0 0.0
    %792 = vmatpush1.xpose.msra.mxu0 0.0
    %793 = vmatprep.subr.mxu0 0.0
    %794 = vmatpush1.xpose.msra.mxu0 0.0
    %795 = vmatprep.subr.mxu0 0.0
    %796 = vmatpush1.xpose.msra.mxu0 0.0
    %797 = vmatprep.subr.mxu0 0.0
    %798 = vmatpush1.xpose.msra.mxu0 0.0
    %799 = vmatprep.subr.mxu0 0.0
    %800 = vmatpush1.xpose.msra.mxu0 0.0
    %801 = vmatprep.subr.mxu0 0.0
    %802 = vmatpush1.xpose.msra.mxu0 0.0
    %803 = vmatprep.subr.mxu0 0.0
    %804 = vmatpush1.xpose.msra.mxu0 0.0
    %805 = vmatprep.subr.mxu0 0.0
    %806 = vmatpush1.xpose.msra.mxu0 0.0
    %807 = vmatprep.subr.mxu0 0.0
    %808 = vmatpush1.xpose.msra.mxu0 0.0
    %809 = vmatprep.subr.mxu0 0.0
    %810 = vmatpush1.xpose.msra.mxu0 0.0
    %811 = vmatprep.subr.mxu0 0.0
    %812 = vmatpush1.xpose.msra.mxu0 0.0
    %813 = vmatprep.subr.mxu0 0.0
    %814 = vmatpush1.xpose.msra.mxu0 0.0
    %815 = vmatprep.subr.mxu0 0.0
    %816 = vmatpush1.xpose.msra.mxu0 0.0
    %817 = vmatprep.subr.mxu0 0.0
    %818 = vmatpush1.xpose.msra.mxu0 0.0
    %819 = vmatprep.subr.mxu0 0.0
    %820 = vmatpush1.xpose.msra.mxu0 0.0
    %821 = vmatprep.subr.mxu0 0.0
    %822 = vmatpush1.xpose.msra.mxu0 0.0
    %823 = vmatprep.subr.mxu0 0.0
    %824 = vmatpush1.xpose.msra.mxu0 0.0
    %825 = vmatprep.subr.mxu0 0.0
    %826 = vmatpush1.xpose.msra.mxu0 0.0
    %827 = vmatprep.subr.mxu0 0.0
    %828 = vmatpush1.xpose.msra.mxu0 0.0
    %829 = vmatprep.subr.mxu0 0.0
    %830 = vmatpush1.xpose.msra.mxu0 0.0
    %831 = vmatprep.subr.mxu0 0.0
    %832 = vmatpush1.xpose.msra.mxu0 0.0
    %833 = vmatprep.mubr.f32.mxu0 0.0
    %834 = vmatmul.mubr.f32.gmra.mrb[0].mxu0 %v743
    %v835 = vpop.f32.mrb[0].mxu0
    %v836 = vadd.f32 0.0, %v835
    %v837 = vpop.f32.mrb[0].mxu0
    %838 = vdwg.mxu0
    %vm839 = vcmask 516096
    %v840 = vsel %vm839, %v739, -inf
    %841 = vmax.xlane.f32.xlu0 %v840
    %v842 = vpop.xlane.xlu0 %841
    %v843 = vsel %vm839, %v836, -inf
    %844 = vmax.xlane.f32.xlu0 %v843
    %v845 = vpop.xlane.xlu0 %844
    %v846 = vsub.f32 %v739, %v842
    %v847 = vsub.f32 %v836, %v845
    %v848 = vmul.f32 %v846, 1.442695
    %v849 = vpow.pop %v848
    %v850 = vmul.f32 %v847, 1.442695
    %v851 = vpow.pop %v850
    %v852 = vsel %vm839, %v849, 0.0
    %853 = vadd.xlane.f32.xlu0 %v852
    %v854 = vpop.xlane.xlu0 %853
    %v855 = vsel %vm839, %v851, 0.0
    %856 = vadd.xlane.f32.xlu0 %v855
    %v857 = vpop.xlane.xlu0 %856
    %v858 = vrcp.pop %v854
    %v859 = vrcp.pop %v857
    %v860 = vmul.f32 %v849, %v858
    %v861 = vmul.f32 %v851, %v859
    %862 = vst.msk [vmem:[#allocation4] sm:$0x1] %vm839, %v860
    %863 = vst.msk [vmem:[#allocation4 + $0x1] sm:$0x1] %vm839, %v861
    %v864 = vpack.c.bf16 %v860, %v860
    %v865 = vpack.c.bf16 %v861, %v861
    %vm870 = vcmask 523264
    %v872 = vsel %vm870, %v864, 0
    %874 = vmatprep.subr.bf16.mxu0 0
    %875 = vmatpush1.bf16.msra.mxu0 %v96
    %876 = vmatprep.subr.bf16.mxu0 0
    %877 = vmatpush1.bf16.msra.mxu0 %v97
    %878 = vmatprep.subr.bf16.mxu0 0
    %879 = vmatpush1.bf16.msra.mxu0 %v98
    %880 = vmatprep.subr.bf16.mxu0 0
    %881 = vmatpush1.bf16.msra.mxu0 %v99
    %882 = vmatprep.subr.bf16.mxu0 0
    %883 = vmatpush1.bf16.msra.mxu0 0
    %884 = vmatprep.subr.bf16.mxu0 0
    %885 = vmatpush1.bf16.msra.mxu0 0
    %886 = vmatprep.subr.bf16.mxu0 0
    %887 = vmatpush1.bf16.msra.mxu0 0
    %888 = vmatprep.subr.bf16.mxu0 0
    %889 = vmatpush1.bf16.msra.mxu0 0
    %890 = vmatprep.subr.bf16.mxu0 0
    %891 = vmatpush1.bf16.msra.mxu0 0
    %892 = vmatprep.subr.bf16.mxu0 0
    %893 = vmatpush1.bf16.msra.mxu0 0
    %894 = vmatprep.subr.bf16.mxu0 0
    %895 = vmatpush1.bf16.msra.mxu0 0
    %896 = vmatprep.subr.bf16.mxu0 0
    %897 = vmatpush1.bf16.msra.mxu0 0
    %898 = vmatprep.subr.bf16.mxu0 0
    %899 = vmatpush1.bf16.msra.mxu0 0
    %900 = vmatprep.subr.bf16.mxu0 0
    %901 = vmatpush1.bf16.msra.mxu0 0
    %902 = vmatprep.subr.bf16.mxu0 0
    %903 = vmatpush1.bf16.msra.mxu0 0
    %904 = vmatprep.subr.bf16.mxu0 0
    %905 = vmatpush1.bf16.msra.mxu0 0
    %906 = vmatprep.mubr.bf16.mxu0 0
    %907 = vmatmul.mubr.bf16.gmra.mrb[0].mxu0 %v872
    %v908 = vpop.f32.mrb[0].mxu0
    %v909 = vadd.f32 0.0, %v908
    %v910 = vpop.f32.mrb[0].mxu0
    %v911 = vpop.f32.mrb[0].mxu0
    %v912 = vpop.f32.mrb[0].mxu0
    %913 = vdwg.mxu0
    %v919 = vsel %vm870, %v865, 0
    %921 = vmatprep.subr.bf16.mxu0 0
    %922 = vmatpush1.bf16.msra.mxu0 %v100
    %923 = vmatprep.subr.bf16.mxu0 0
    %924 = vmatpush1.bf16.msra.mxu0 %v101
    %925 = vmatprep.subr.bf16.mxu0 0
    %926 = vmatpush1.bf16.msra.mxu0 %v102
    %927 = vmatprep.subr.bf16.mxu0 0
    %928 = vmatpush1.bf16.msra.mxu0 %v103
    %929 = vmatprep.subr.bf16.mxu0 0
    %930 = vmatpush1.bf16.msra.mxu0 0
    %931 = vmatprep.subr.bf16.mxu0 0
    %932 = vmatpush1.bf16.msra.mxu0 0
    %933 = vmatprep.subr.bf16.mxu0 0
    %934 = vmatpush1.bf16.msra.mxu0 0
    %935 = vmatprep.subr.bf16.mxu0 0
    %936 = vmatpush1.bf16.msra.mxu0 0
    %937 = vmatprep.subr.bf16.mxu0 0
    %938 = vmatpush1.bf16.msra.mxu0 0
    %939 = vmatprep.subr.bf16.mxu0 0
    %940 = vmatpush1.bf16.msra.mxu0 0
    %941 = vmatprep.subr.bf16.mxu0 0
    %942 = vmatpush1.bf16.msra.mxu0 0
    %943 = vmatprep.subr.bf16.mxu0 0
    %944 = vmatpush1.bf16.msra.mxu0 0
    %945 = vmatprep.subr.bf16.mxu0 0
    %946 = vmatpush1.bf16.msra.mxu0 0
    %947 = vmatprep.subr.bf16.mxu0 0
    %948 = vmatpush1.bf16.msra.mxu0 0
    %949 = vmatprep.subr.bf16.mxu0 0
    %950 = vmatpush1.bf16.msra.mxu0 0
    %951 = vmatprep.subr.bf16.mxu0 0
    %952 = vmatpush1.bf16.msra.mxu0 0
    %953 = vmatprep.mubr.bf16.mxu0 0
    %954 = vmatmul.mubr.bf16.gmra.mrb[0].mxu0 %v919
    %v955 = vpop.f32.mrb[0].mxu0
    %v956 = vadd.f32 0.0, %v955
    %v957 = vpop.f32.mrb[0].mxu0
    %v958 = vpop.f32.mrb[0].mxu0
    %v959 = vpop.f32.mrb[0].mxu0
    %960 = vdwg.mxu0
    %vm961 = vcmask 253952
    %962 = vst.msk [vmem:[#allocation2] sm:$0x1] %vm961, %v909
    %963 = vst.msk [vmem:[#allocation2 + $0x1] sm:$0x1] %vm961, %v956
    // Predicated region
    $region38: #{tpu_custom_call.1} parent=1 // pred_check
      _
    $region39: #{tpu_custom_call.1} parent=1 // pred_check_branch
      %965 = sbr.rel (0) target = $region41
    $region40: #{tpu_custom_call.1} parent=1 // pred_region
      %s967 = ssub.s32 32, 32
      %968 = vsyncadd [#allocation3], %s967
      %s969 = sshll.u32 [#allocation2], 4
      %s970 = int_to_ptr.vmem [resolvable:$true] %s969
      %975 = dma.vmem_to_hbm [thread:$0]  %s970, 32, %s9, [#allocation3], 16, 16, 1
    $region41: #{tpu_custom_call.1} parent=1 // pred_fallthru
      _
    // Predicated region
    $region42: #{tpu_custom_call.1} parent=1 // pred_check
      _
    $region43: #{tpu_custom_call.1} parent=1 // pred_check_branch
      %977 = sbr.rel (0) target = $region45
    $region44: #{tpu_custom_call.1} parent=1 // pred_region
      %s979 = ssub.s32 32, 32
      %980 = vsyncadd [#allocation5], %s979
      %s981 = sshll.u32 [#allocation4], 4
      %s982 = int_to_ptr.vmem [resolvable:$true] %s981
      %987 = dma.vmem_to_hbm [thread:$0]  %s982, 32, %s10, [#allocation5], 16, 16, 1
    $region45: #{tpu_custom_call.1} parent=1 // pred_fallthru
      _
    // Predicated region
    $region46: #{tpu_custom_call.1} parent=1 // pred_check
      _
    $region47: #{tpu_custom_call.1} parent=1 // pred_check_branch
      %989 = sbr.rel (0) target = $region49
    $region48: #{tpu_custom_call.1} parent=1 // pred_region
      %990 = dma.done [#allocation3], 32
    $region49: #{tpu_custom_call.1} parent=1 // pred_fallthru
      _
    // Predicated region
    $region50: #{tpu_custom_call.1} parent=1 // pred_check
      _
    $region51: #{tpu_custom_call.1} parent=1 // pred_check_branch
      %992 = sbr.rel (0) target = $region53
    $region52: #{tpu_custom_call.1} parent=1 // pred_region
      %993 = dma.done [#allocation5], 32
    $region53: #{tpu_custom_call.1} parent=1 // pred_fallthru
      _
    %994 = vsyncpa [#allocation3], 1
    %995 = vsyncpa [#allocation5], 1

</llo_original>
